<compile_context>
chip_gen: v7x
topology: tpu7x:2x2x1
jax: 0.10.0
libtpu: 0.0.40
codegen_flags: <defaults>
</compile_context>

<pallas_src>
import jax
import jax.numpy as jnp
from jax.experimental import pallas as pl
from jax.experimental.pallas import tpu as pltpu


# --------------------------------------------------------------------------- #
# Helpers
# --------------------------------------------------------------------------- #

_TARGET_TILE_BYTES = 2 * 1024 * 1024      # ~2 MiB per streamed tile
_VMEM_LIMIT_BYTES = 32 * 1024 * 1024      # explicit scoped-VMEM limit (safe on v5e/v6e/v7x)


def _round_up(v, m):
    return -(-v // m) * m


def _sublane_multiple(dtype):
    # f32 -> 8 rows, bf16 -> 16, int8/fp8 -> 32 (sub-32-bit packs along sublanes).
    itemsize = jnp.dtype(dtype).itemsize
    return max(8, 32 // max(itemsize, 1))


def _choose_tiles(B, H, dtype):
    """Pick (block_b, block_h) for a lane-dense elementwise stream."""
    itemsize = jnp.dtype(dtype).itemsize
    sub = _sublane_multiple(dtype)

    # Tile H (lane axis, multiples of 128) only when a single row already blows
    # past the tile budget (very large H, small B).
    if H % 128 == 0 and H * itemsize * sub > _TARGET_TILE_BYTES:
        block_h = max(128, (_TARGET_TILE_BYTES // (sub * itemsize)) // 128 * 128)
        block_h = min(block_h, H)
    else:
        block_h = H

    rows = _TARGET_TILE_BYTES // max(block_h * itemsize, 1)
    rows = max(sub, (rows // sub) * sub)
    block_b = min(B, rows)

    # v7x megacore: if the batch has to be tiled anyway, make sure there are at
    # least 2 grid steps along it so both TensorCores get work.
    if B > block_b:
        half = max(sub, _round_up(-(-B // 2), sub))
        block_b = min(block_b, half)

    return block_b, block_h


# --------------------------------------------------------------------------- #
# Single-step kernel (matches IndRNNCell_onlyrecurrent.forward)
# --------------------------------------------------------------------------- #

def _indrnn_cell_kernel(x_ref, h_ref, w_ref, o_ref):
    # x_ref/h_ref/o_ref: (block_b, block_h); w_ref: (1, block_h) broadcast over rows.
    cd = o_ref.dtype
    x = x_ref[...].astype(cd)
    h = h_ref[...].astype(cd)
    w = w_ref[...].astype(cd)
    o_ref[...] = jnp.maximum(x + h * w, 0.0)


def indrnn_cell_onlyrecurrent(x, hx, weight_hh):
    """x, hx: (B, H); weight_hh: (H,).  Returns relu(x + hx * weight_hh)."""
    B, H = x.shape
    assert hx.shape == (B, H) and weight_hh.shape == (H,)

    out_dtype = jnp.promote_types(jnp.promote_types(x.dtype, hx.dtype), weight_hh.dtype)
    w2 = weight_hh.reshape(1, H)

    block_b, block_h = _choose_tiles(B, H, out_dtype)
    grid = (pl.cdiv(B, block_b), pl.cdiv(H, block_h))

    itemsize = jnp.dtype(out_dtype).itemsize
    cost = pl.CostEstimate(
        flops=3 * B * H,
        transcendentals=0,
        bytes_accessed=3 * B * H * itemsize + H * jnp.dtype(weight_hh.dtype).itemsize,
    )

    return pl.pallas_call(
        _indrnn_cell_kernel,
        out_shape=jax.ShapeDtypeStruct((B, H), out_dtype),
        grid_spec=pltpu.PrefetchScalarGridSpec(
            num_scalar_prefetch=0,
            grid=grid,
            in_specs=[
                pl.BlockSpec((block_b, block_h), lambda i, j: (i, j)),
                pl.BlockSpec((block_b, block_h), lambda i, j: (i, j)),
                pl.BlockSpec((1, block_h), lambda i, j: (0, j)),
            ],
            out_specs=pl.BlockSpec((block_b, block_h), lambda i, j: (i, j)),
        ),
        compiler_params=pltpu.CompilerParams(
            dimension_semantics=("parallel", "parallel"),
            vmem_limit_bytes=_VMEM_LIMIT_BYTES,
        ),
        cost_estimate=cost,
    )(x, hx, w2)


# --------------------------------------------------------------------------- #
# Fused multi-step kernel: h resident in VMEM across the time axis
# --------------------------------------------------------------------------- #

def _indrnn_seq_kernel(x_ref, h0_ref, w_ref, o_ref, h_state):
    # x_ref/o_ref: (1, block_b, H); h0_ref: (block_b, H); w_ref: (1, H)
    # h_state: persistent VMEM scratch carrying h across the (innermost) t axis.
    t = pl.program_id(1)
    cd = h_state.dtype

    @pl.when(t == 0)
    def _():
        h_state[...] = h0_ref[...].astype(cd)

    x = x_ref[0].astype(cd)
    w = w_ref[...].astype(cd)
    h_new = jnp.maximum(x + h_state[...] * w, 0.0)
    h_state[...] = h_new
    o_ref[0] = h_new.astype(o_ref.dtype)


def indrnn_onlyrecurrent_sequence(x_seq, hx, weight_hh):
    """x_seq: (T, B, H); hx: (B, H); weight_hh: (H,).  Returns all h_t, shape (T, B, H)."""
    T, B, H = x_seq.shape
    assert hx.shape == (B, H) and weight_hh.shape == (H,)

    out_dtype = jnp.promote_types(jnp.promote_types(x_seq.dtype, hx.dtype), weight_hh.dtype)
    w2 = weight_hh.reshape(1, H)

    # Full H per tile (typical IndRNN hidden sizes fit easily); tile batch only.
    # TODO(synk): add an H grid axis here if hidden sizes ever exceed ~16K lanes.
    block_b, _ = _choose_tiles(B, H, out_dtype)
    grid = (pl.cdiv(B, block_b), T)

    itemsize = jnp.dtype(out_dtype).itemsize
    cost = pl.CostEstimate(
        flops=3 * T * B * H,
        transcendentals=0,
        bytes_accessed=(2 * T + 1) * B * H * itemsize
        + H * jnp.dtype(weight_hh.dtype).itemsize,
    )

    return pl.pallas_call(
        _indrnn_seq_kernel,
        out_shape=jax.ShapeDtypeStruct((T, B, H), out_dtype),
        grid_spec=pltpu.PrefetchScalarGridSpec(
            num_scalar_prefetch=0,
            grid=grid,
            in_specs=[
                pl.BlockSpec((1, block_b, H), lambda i, t: (t, i, 0)),
                pl.BlockSpec((block_b, H), lambda i, t: (i, 0)),
                pl.BlockSpec((1, H), lambda i, t: (0, 0)),
            ],
            out_specs=pl.BlockSpec((1, block_b, H), lambda i, t: (t, i, 0)),
            scratch_shapes=[pltpu.VMEM((block_b, H), out_dtype)],
        ),
        compiler_params=pltpu.CompilerParams(
            dimension_semantics=("parallel", "arbitrary"),
            vmem_limit_bytes=_VMEM_LIMIT_BYTES,
        ),
        cost_estimate=cost,
    )(x_seq, hx, w2)


# --------------------------------------------------------------------------- #
# Reference + self-test
# --------------------------------------------------------------------------- #

def reference_indrnn_cell(x, hx, weight_hh):
    xf = x.astype(jnp.float32)
    hf = hx.astype(jnp.float32)
    wf = weight_hh.astype(jnp.float32)
    return jnp.maximum(xf + hf * wf[None, :], 0.0).astype(x.dtype)


if __name__ == "__main__":
    # Shapes implied by the module: hidden_size on the lane axis, small batch.
    hidden_size = 128
    batch = 8
    seq_len = 6

    key = jax.random.PRNGKey(0)
    k_w, k_x, k_h, k_xs = jax.random.split(key, 4)

    # reset_parameters(): weight_hh ~ Uniform(0, 1)
    weight_hh = jax.random.uniform(k_w, (hidden_size,), dtype=jnp.float32)
    # "input" is already w_ih * x + b_ih per the module docstring.
    x = jax.random.normal(k_x, (batch, hidden_size), dtype=jnp.float32)
    hx = jax.random.normal(k_h, (batch, hidden_size), dtype=jnp.float32)

    # Single step (the nn.Module forward).
    out = jax.block_until_ready(indrnn_cell_onlyrecurrent(x, hx, weight_hh))
    ref = reference_indrnn_cell(x, hx, weight_hh)
    assert out.shape == (batch, hidden_size)
    assert jnp.max(jnp.abs(out - ref)) < 1e-5

    # Fused T-step recurrence (how the cell is used in practice).
    xs = jax.random.normal(k_xs, (seq_len, batch, hidden_size), dtype=jnp.float32)
    hs = jax.block_until_ready(indrnn_onlyrecurrent_sequence(xs, hx, weight_hh))
    h_ref = hx
    ref_steps = []
    for t in range(seq_len):
        h_ref = reference_indrnn_cell(xs[t], h_ref, weight_hh)
        ref_steps.append(h_ref)
    ref_seq = jnp.stack(ref_steps)
    assert hs.shape == (seq_len, batch, hidden_size)
    assert jnp.max(jnp.abs(hs - ref_seq)) < 1e-4

    print("KERNEL_OK")
</pallas_src>

<mosaic_0001>
module attributes {stable_mosaic.version = 11 : i64} {
  func.func @_indrnn_cell_kernel(%arg0: i32, %arg1: i32, %arg2: memref<8x128xf32, #tpu.memory_space<vmem>>, %arg3: memref<8x128xf32, #tpu.memory_space<vmem>>, %arg4: memref<1x128xf32, #tpu.memory_space<vmem>>, %arg5: memref<8x128xf32, #tpu.memory_space<vmem>>) attributes {dimension_semantics = [#tpu.dimension_semantics<parallel>, #tpu.dimension_semantics<parallel>], iteration_bounds = array<i64: 1, 1>, scalar_prefetch = 0 : i64, scratch_operands = 0 : i64, tpu.core_type = #tpu.core_type<tc>, window_params = [{transform_indices = @transform_0, window_bounds = array<i64: 8, 128>}, {transform_indices = @transform_1, window_bounds = array<i64: 8, 128>}, {transform_indices = @transform_2, window_bounds = array<i64: 1, 128>}, {transform_indices = @transform_3, window_bounds = array<i64: 8, 128>}]} {
    %c0 = arith.constant 0 : index
    %c0_0 = arith.constant 0 : index
    %0 = vector.load %arg2[%c0, %c0_0] : memref<8x128xf32, #tpu.memory_space<vmem>>, vector<8x128xf32>
    %c0_1 = arith.constant 0 : index
    %c0_2 = arith.constant 0 : index
    %1 = vector.load %arg3[%c0_1, %c0_2] : memref<8x128xf32, #tpu.memory_space<vmem>>, vector<8x128xf32>
    %c0_3 = arith.constant 0 : index
    %c0_4 = arith.constant 0 : index
    %2 = vector.load %arg4[%c0_3, %c0_4] : memref<1x128xf32, #tpu.memory_space<vmem>>, vector<1x128xf32>
    %3 = vector.broadcast %2 : vector<1x128xf32> to vector<8x128xf32>
    %4 = arith.mulf %1, %3 : vector<8x128xf32>
    %5 = arith.addf %0, %4 : vector<8x128xf32>
    %cst = arith.constant 0.000000e+00 : f32
    %6 = vector.broadcast %cst : f32 to vector<8x128xf32>
    %7 = arith.maximumf %5, %6 : vector<8x128xf32>
    %c0_5 = arith.constant 0 : index
    %c0_6 = arith.constant 0 : index
    %8 = vector.load %arg5[%c0_5, %c0_6] : memref<8x128xf32, #tpu.memory_space<vmem>>, vector<8x128xf32>
    tpu.vector_store %arg5[%c0_5, %c0_6], %7 {strides = array<i32>} : memref<8x128xf32, #tpu.memory_space<vmem>>, vector<8x128xf32>,
    return
  }
  func.func @transform_0(%arg0: i32, %arg1: i32) -> (i32, i32) {
    %c0_i32 = arith.constant 0 : i32
    return %arg0, %arg1 : i32, i32
  }
  func.func @transform_1(%arg0: i32, %arg1: i32) -> (i32, i32) {
    %c0_i32 = arith.constant 0 : i32
    return %arg0, %arg1 : i32, i32
  }
  func.func @transform_2(%arg0: i32, %arg1: i32) -> (i32, i32) {
    %c0_i32 = arith.constant 0 : i32
    %c0_i32_0 = arith.constant 0 : i32
    return %c0_i32, %arg1 : i32, i32
  }
  func.func @transform_3(%arg0: i32, %arg1: i32) -> (i32, i32) {
    %c0_i32 = arith.constant 0 : i32
    return %arg0, %arg1 : i32, i32
  }
}

</mosaic_0001>

<llo_original>
// kernel: tpu_custom_call.1
$region0: #{tpu_custom_call.1}
  #allocation0 [shape = 'u32[]', space=smem, size = 0x4, offset = 0x4, fixed_abs, tag = 'smem constant byte address 0x4 - core index']
  #allocation1 [shape = 'u32[144,128]{1,0:T(1,128)}', space=vmem, size = 0x12000, scoped, tag = 'internal scratch']
  %s0 = inlined_call_operand.hbm [shape: f32[8,128], index: 0, kind: input, shape index: {}]
  %s1 = inlined_call_operand.hbm [shape: f32[8,128], index: 1, kind: input, shape index: {}]
  %s2 = inlined_call_operand.vmem [shape: f32[1,128], index: 2, kind: input, shape index: {}]
  %s3 = inlined_call_operand.hbm [shape: f32[8,128], index: 3, kind: output, shape index: {}]
  %s4 = sld [smem:[#allocation0]]
  $region30: #{tpu_custom_call.1} parent=0
    _
  %s6 = ssub.s32 1, %s4
  %s7 = scalar_select 0, %s6, %s4
  $region1: #{tpu_custom_call.1} parent=0
    #allocation2 [shape = 'u8[4096]{0}', space=vmem, size = 0x1000, scoped, tag = 'input window, operand 0, single buffered']
    #allocation3 [shape = 's32[1]{0}', space=sflag, size = 0x4, scoped, tag = 'scoped memory for tpu_custom_call.1']
    #allocation4 [shape = 's32[1]{0}', space=sflag, size = 0x4, scoped, tag = 'scoped memory for tpu_custom_call.1']
    #allocation5 [shape = 'u8[4096]{0}', space=vmem, size = 0x1000, scoped, tag = 'input window, operand 1, single buffered']
    #allocation6 [shape = 's32[1]{0}', space=sflag, size = 0x4, scoped, tag = 'scoped memory for tpu_custom_call.1']
    #allocation7 [shape = 'u8[4096]{0}', space=vmem, size = 0x1000, scoped, tag = 'output window, operand 0, single buffered']
    %8 = vsyncpa [#allocation3], 0
    %9 = vsyncpa [#allocation6], 0
    %10 = vsyncpa [#allocation4], 0
    // Predicated region
    $region2: #{tpu_custom_call.1} parent=1 // pred_check
      _
    $region3: #{tpu_custom_call.1} parent=1 // pred_check_branch
      %12 = sbr.rel (0) target = $region5
    $region4: #{tpu_custom_call.1} parent=1 // pred_region
      %s14 = ssub.s32 128, 128
      %15 = vsyncadd [#allocation3], %s14
      %s17 = sshll.u32 [#allocation2], 4
      %s18 = int_to_ptr.vmem [resolvable:$true] %s17
      %20 = dma.hbm_to_vmem [thread:$0]  %s0, 128, %s18, [#allocation3]
    $region5: #{tpu_custom_call.1} parent=1 // pred_fallthru
      _
    // Predicated region
    $region6: #{tpu_custom_call.1} parent=1 // pred_check
      _
    $region7: #{tpu_custom_call.1} parent=1 // pred_check_branch
      %22 = sbr.rel (0) target = $region9
    $region8: #{tpu_custom_call.1} parent=1 // pred_region
      %s24 = ssub.s32 128, 128
      %25 = vsyncadd [#allocation6], %s24
      %s27 = sshll.u32 [#allocation5], 4
      %s28 = int_to_ptr.vmem [resolvable:$true] %s27
      %30 = dma.hbm_to_vmem [thread:$0]  %s1, 128, %s28, [#allocation6]
    $region9: #{tpu_custom_call.1} parent=1 // pred_fallthru
      _
    // Predicated region
    $region10: #{tpu_custom_call.1} parent=1 // pred_check
      _
    $region11: #{tpu_custom_call.1} parent=1 // pred_check_branch
      %32 = sbr.rel (0) target = $region13
    $region12: #{tpu_custom_call.1} parent=1 // pred_region
      _
    $region13: #{tpu_custom_call.1} parent=1 // pred_fallthru
      _
    // Predicated region
    $region14: #{tpu_custom_call.1} parent=1 // pred_check
      _
    $region15: #{tpu_custom_call.1} parent=1 // pred_check_branch
      %34 = sbr.rel (0) target = $region17
    $region16: #{tpu_custom_call.1} parent=1 // pred_region
      %35 = dma.done [#allocation3], 128
    $region17: #{tpu_custom_call.1} parent=1 // pred_fallthru
      _
    // Predicated region
    $region18: #{tpu_custom_call.1} parent=1 // pred_check
      _
    $region19: #{tpu_custom_call.1} parent=1 // pred_check_branch
      %37 = sbr.rel (0) target = $region21
    $region20: #{tpu_custom_call.1} parent=1 // pred_region
      %38 = dma.done [#allocation6], 128
    $region21: #{tpu_custom_call.1} parent=1 // pred_fallthru
      _
    %v39 = vld [vmem:[#allocation2] sm:$0xff]
    %v40 = vld [vmem:[#allocation5] sm:$0xff]
    %v41 = vld [vmem:[%s2] sm:$0x1]
    %v43 = vlaneseq
    %v44 = vshrl.u32 %v43, 7
    %v45 = vsub.s32 0, %v44
    %v46 = vrot.slane %v41, %v45
    %v48 = vmul.f32 %v40, %v46
    %v49 = vadd.f32 %v39, %v48
    %v50 = vmax.f32 %v49, 0.0
    %51 = vst [vmem:[#allocation7] sm:$0xff] %v50
    // Predicated region
    $region22: #{tpu_custom_call.1} parent=1 // pred_check
      _
    $region23: #{tpu_custom_call.1} parent=1 // pred_check_branch
      %53 = sbr.rel (0) target = $region25
    $region24: #{tpu_custom_call.1} parent=1 // pred_region
      %s55 = ssub.s32 128, 128
      %56 = vsyncadd [#allocation4], %s55
      %s58 = sshll.u32 [#allocation7], 4
      %s59 = int_to_ptr.vmem [resolvable:$true] %s58
      %61 = dma.vmem_to_hbm [thread:$0]  %s59, 128, %s3, [#allocation4]
    $region25: #{tpu_custom_call.1} parent=1 // pred_fallthru
      _
    // Predicated region
    $region26: #{tpu_custom_call.1} parent=1 // pred_check
      _
    $region27: #{tpu_custom_call.1} parent=1 // pred_check_branch
      %63 = sbr.rel (0) target = $region29
    $region28: #{tpu_custom_call.1} parent=1 // pred_region
      %64 = dma.done [#allocation4], 128
    $region29: #{tpu_custom_call.1} parent=1 // pred_fallthru
      _
    %65 = vsyncpa [#allocation3], 1
    %66 = vsyncpa [#allocation6], 1
    %67 = vsyncpa [#allocation4], 1

</llo_original>
